<compile_context>
chip_gen: v5e
topology: v5e:2x2
jax: 0.10.0
libtpu: 0.0.40
codegen_flags: <defaults>
</compile_context>

<pallas_src>
import functools
import math

import numpy as np
import jax
import jax.numpy as jnp
from jax import lax
from jax.experimental import pallas as pl
from jax.experimental.pallas import tpu as pltpu


def attention_kernel(x_ref, wqkv_ref, pos_ref, mask_ref, w1_ref, b1_ref,
                     w2_ref, b2_ref, dist_ref, bo_ref, o_ref, *, scale, dim):
    D = dim
    x2 = x_ref[...]                                                      # (R, D)

    # Fused q/k/v(+out) projection: one MXU push, static lane slices.
    qkv = jnp.dot(x2, wqkv_ref[...], preferred_element_type=jnp.float32)  # (R, 3D)
    q = qkv[:, 0 * D:1 * D]
    k = qkv[:, 1 * D:2 * D]
    vproj = qkv[:, 2 * D:3 * D]          # = x @ (Wv @ Wo): to_out folded in

    # scores = q @ k^T * scale, NT contraction (transpose folded into MXU load),
    # with the block-diagonal -1e30 mask so cross-channel entries vanish.
    dots = lax.dot_general(q, k, dimension_numbers=(((1,), (1,)), ((), ())),
                           preferred_element_type=jnp.float32) * scale    # (R, R)
    dots = dots + mask_ref[...]
    m = jnp.max(dots, axis=-1, keepdims=True)
    e = jnp.exp(dots - m)
    attn = e / jnp.sum(e, axis=-1, keepdims=True)                         # off-block == 0

    # attn_weight = attn + pos_embedding (block-diag expanded)
    attn_weight = attn + pos_ref[...]                                     # (R, R)

    # make_var: Linear(L,L) (block-diag) -> ReLU -> Linear(L,1) as VPU reduce.
    # b1 is block-structured (zero off-block) so off-block h is exactly 0.
    h = jnp.dot(attn_weight, w1_ref[...],
                preferred_element_type=jnp.float32) + b1_ref[...]
    h = jnp.maximum(h, 0.0)
    w = jnp.sum(h * w2_ref[...], axis=-1, keepdims=True) + b2_ref[0]      # (R, 1)

    # weight = exp(-distance / (2*w*w + 1e-6)); re-softmax attn * weight.
    inv_var = 1.0 / (2.0 * w * w + 1e-6)
    weight = jnp.exp(-dist_ref[...] * inv_var)                            # (R, R)
    # attn*weight ∈ [0,1]; mask entries are -1e30 -> exp underflows to 0.
    e2 = jnp.exp(attn * weight + mask_ref[...])                           # no max needed
    attn2 = e2 / jnp.sum(e2, axis=-1, keepdims=True)

    # out = attn2 @ (x @ Wv @ Wo) + bo   (to_out already folded into vproj)
    out = jnp.dot(attn2, vproj, preferred_element_type=jnp.float32) + bo_ref[...]
    o_ref[...] = out.astype(o_ref.dtype)


def _block_diag(blocks):
    """(n, r, c) stack of blocks -> (n*r, n*c) block-diagonal matrix."""
    n, r, c = blocks.shape
    eye = jnp.eye(n, dtype=blocks.dtype)
    return (eye[:, None, :, None] * blocks[:, :, None, :]).reshape(n * r, n * c)


def _batches_per_step(B):
    """v7x has 2 TensorCores: keep one batch element per parallel grid step.
    v5e/v6e have a single TC: a multi-step grid is pure serial overhead, so
    fold the whole batch into one step."""
    try:
        kind = jax.devices()[0].device_kind.lower()
    except Exception:
        kind = ""
    if "v7" in kind and B > 1:
        return 1
    return B


def attention_forward(x, params, *, scale, batches_per_step=None):
    B, C, L, D = x.shape
    nb = _batches_per_step(B) if batches_per_step is None else batches_per_step
    assert B % nb == 0
    steps = B // nb
    R = nb * C * L                     # rows handled per grid step
    nblk = nb * C                      # number of L-sized diagonal blocks

    # ---- host-side layout plumbing (tiny, done once outside the kernel) ----
    # x flattened to a contiguous 2-D row slab (free reshape on HBM).
    x2 = x.reshape(B * C * L, D)
    # Fused qkv weight with to_out folded into the value projection.
    wqkv = jnp.concatenate(
        [params["wq"], params["wk"], params["wv"] @ params["wo"]], axis=1)   # (D, 3D)
    # Block-diagonal expansions over (batch-rep, channel) blocks.
    pos_bd = _block_diag(jnp.tile(params["pos"], (nb, 1, 1)))                # (R, R)
    neg_mask = (_block_diag(jnp.ones((nblk, L, L), jnp.float32)) - 1.0) * 1e30
    w1_bd = _block_diag(jnp.broadcast_to(params["w1"], (nblk, L, L)))        # (R, R)
    b1_bd = _block_diag(
        jnp.broadcast_to(jnp.broadcast_to(params["b1"], (L, L)), (nblk, L, L)))
    w2_t = jnp.tile(params["w2"], (1, nblk))                                 # (1, R)
    dist_t = jnp.tile(params["dist"], (nblk, nblk))                          # (R, R)

    kernel = functools.partial(attention_kernel, scale=scale, dim=D)

    def rep(shape):
        # grid-invariant full-array VMEM block
        return pl.BlockSpec(shape, lambda *_: (0,) * len(shape))

    out2 = pl.pallas_call(
        kernel,
        out_shape=jax.ShapeDtypeStruct((B * C * L, D), x.dtype),
        grid_spec=pltpu.PrefetchScalarGridSpec(
            num_scalar_prefetch=0,
            grid=(steps,),
            in_specs=[
                pl.BlockSpec((R, D), lambda s: (s, 0)),                # x rows
                rep((D, 3 * D)),                                       # wq|wk|wv@wo
                rep((R, R)),                                           # pos (block-diag)
                rep((R, R)),                                           # -1e30 off-block mask
                rep((R, R)),                                           # make_var[0] W (block-diag)
                rep((R, R)),                                           # make_var[0] b (block-struct)
                rep((1, R)),                                           # make_var[2] W row (tiled)
                pl.BlockSpec(memory_space=pltpu.MemorySpace.SMEM),     # make_var[2] b (scalar)
                rep((R, R)),                                           # distance (tiled)
                rep((1, D)),                                           # to_out bias
            ],
            out_specs=pl.BlockSpec((R, D), lambda s: (s, 0)),
        ),
        compiler_params=pltpu.CompilerParams(
            dimension_semantics=("parallel",)),
    )(x2, wqkv, pos_bd, neg_mask, w1_bd, b1_bd, w2_t, params["b2"],
      dist_t, params["bo"])
    return out2.reshape(B, C, L, D)


def init_params(key, dim, lenth, channels):
    """Deterministic synthetic init mirroring the module's parameter shapes.
    Linear weights are stored transposed (in, out) so the kernel does x @ W;
    make_var's second Linear is stored as a (1, L) row for the VPU reduce."""
    ks = jax.random.split(key, 10)

    def lin_w(k, fan_in, fan_out):
        bound = 1.0 / math.sqrt(fan_in)
        return jax.random.uniform(k, (fan_in, fan_out), jnp.float32, -bound, bound)

    def lin_b(k, fan_in, fan_out):
        bound = 1.0 / math.sqrt(fan_in)
        return jax.random.uniform(k, (1, fan_out), jnp.float32, -bound, bound)

    # distance(H, W): |j - i|^2, squeezed to (L, L)
    idx = np.arange(lenth)
    dist = (np.abs(idx[None, :] - idx[:, None]).astype(np.float32)) ** 2

    bound_l = 1.0 / math.sqrt(lenth)
    return {
        "wq":   lin_w(ks[0], dim, dim),
        "wk":   lin_w(ks[1], dim, dim),
        "wv":   lin_w(ks[2], dim, dim),
        "pos":  jax.random.normal(ks[3], (channels, lenth, lenth), jnp.float32),
        "dist": jnp.asarray(dist),
        "w1":   lin_w(ks[4], lenth, lenth),
        "b1":   lin_b(ks[5], lenth, lenth),
        "w2":   jax.random.uniform(ks[6], (1, lenth), jnp.float32, -bound_l, bound_l),
        "b2":   jax.random.uniform(ks[7], (1,), jnp.float32, -bound_l, bound_l),
        "wo":   lin_w(ks[8], dim, dim),
        "bo":   lin_b(ks[9], dim, dim),
    }


def reference(x, params, *, scale):
    """Pure-JAX f32 replica of the PyTorch forward (for correctness checking)."""
    q = x @ params["wq"]
    k = x @ params["wk"]
    v = x @ params["wv"]
    dots = jnp.einsum("bcld,bcmd->bclm", q, k) * scale
    attn = jax.nn.softmax(dots, axis=-1)
    attn_weight = attn + params["pos"][None]
    h = jnp.maximum(attn_weight @ params["w1"] + params["b1"][0], 0.0)
    w = jnp.sum(h * params["w2"], axis=-1, keepdims=True) + params["b2"]
    weight = jnp.exp(-params["dist"][None, None] / (2.0 * w * w + 1e-6))
    attn2 = jax.nn.softmax(attn * weight, axis=-1)
    out = attn2 @ v
    return out @ params["wo"] + params["bo"][0]


if __name__ == "__main__":
    # Module config: dim=32, lenth=8, channels=4, heads=8, dim_head=64, dropout=0.0
    B, C, L, D = 2, 4, 8, 32
    heads, dim_head = 8, 64
    scale = dim_head ** (-0.5)   # faithful to the module (uses dim_head, not D)

    key = jax.random.PRNGKey(0)
    kx, kp = jax.random.split(key)
    x = jax.random.normal(kx, (B, C, L, D), jnp.float32)
    params = init_params(kp, D, L, C)

    out = attention_forward(x, params, scale=scale)
    out = jax.block_until_ready(out)

    ref = reference(x, params, scale=scale)
    assert out.shape == (B, C, L, D)
    assert jnp.allclose(out, ref, atol=3e-3, rtol=2e-2), \
        float(jnp.max(jnp.abs(out - ref)))

    print("KERNEL_OK")
</pallas_src>

<mosaic_0001>
module attributes {stable_mosaic.version = 11 : i64} {
  func.func @attention_kernel(%arg0: i32, %arg1: memref<64x32xf32, #tpu.memory_space<vmem>>, %arg2: memref<32x96xf32, #tpu.memory_space<vmem>>, %arg3: memref<64x64xf32, #tpu.memory_space<vmem>>, %arg4: memref<64x64xf32, #tpu.memory_space<vmem>>, %arg5: memref<64x64xf32, #tpu.memory_space<vmem>>, %arg6: memref<64x64xf32, #tpu.memory_space<vmem>>, %arg7: memref<1x64xf32, #tpu.memory_space<vmem>>, %arg8: memref<1xf32, #tpu.memory_space<smem>>, %arg9: memref<64x64xf32, #tpu.memory_space<vmem>>, %arg10: memref<1x32xf32, #tpu.memory_space<vmem>>, %arg11: memref<64x32xf32, #tpu.memory_space<vmem>>) attributes {dimension_semantics = [#tpu.dimension_semantics<parallel>], iteration_bounds = array<i64: 1>, scalar_prefetch = 0 : i64, scratch_operands = 0 : i64, tpu.core_type = #tpu.core_type<tc>, window_params = [{transform_indices = @transform_0, window_bounds = array<i64: 64, 32>}, {pipeline_mode = #tpu.pipeline_mode<synchronous>, transform_indices = @transform_1, window_bounds = array<i64: 32, 96>}, {pipeline_mode = #tpu.pipeline_mode<synchronous>, transform_indices = @transform_2, window_bounds = array<i64: 64, 64>}, {pipeline_mode = #tpu.pipeline_mode<synchronous>, transform_indices = @transform_3, window_bounds = array<i64: 64, 64>}, {pipeline_mode = #tpu.pipeline_mode<synchronous>, transform_indices = @transform_4, window_bounds = array<i64: 64, 64>}, {pipeline_mode = #tpu.pipeline_mode<synchronous>, transform_indices = @transform_5, window_bounds = array<i64: 64, 64>}, {pipeline_mode = #tpu.pipeline_mode<synchronous>, transform_indices = @transform_6, window_bounds = array<i64: 1, 64>}, {transform_indices = @transform_7, window_bounds = array<i64: 1>}, {pipeline_mode = #tpu.pipeline_mode<synchronous>, transform_indices = @transform_8, window_bounds = array<i64: 64, 64>}, {pipeline_mode = #tpu.pipeline_mode<synchronous>, transform_indices = @transform_9, window_bounds = array<i64: 1, 32>}, {transform_indices = @transform_10, window_bounds = array<i64: 64, 32>}]} {
    %c0 = arith.constant 0 : index
    %c0_0 = arith.constant 0 : index
    %0 = vector.load %arg1[%c0, %c0_0] : memref<64x32xf32, #tpu.memory_space<vmem>>, vector<64x32xf32>
    %c0_1 = arith.constant 0 : index
    %c0_2 = arith.constant 0 : index
    %1 = vector.load %arg2[%c0_1, %c0_2] : memref<32x96xf32, #tpu.memory_space<vmem>>, vector<32x96xf32>
    %cst = arith.constant dense<0.000000e+00> : vector<64x96xf32>
    %2 = tpu.matmul %0, %1, %cst {dimension_numbers = #tpu.dot_dimension_numbers<[1], [0], [0], [1], [0, 0, 1, 1], [], []>} : vector<64x32xf32>, vector<32x96xf32>, vector<64x96xf32> -> vector<64x96xf32>
    %3 = vector.extract_strided_slice %2 {offsets = [0, 0], sizes = [64, 32], strides = [1, 1]} : vector<64x96xf32> to vector<64x32xf32>
    %4 = vector.extract_strided_slice %2 {offsets = [0, 32], sizes = [64, 32], strides = [1, 1]} : vector<64x96xf32> to vector<64x32xf32>
    %5 = vector.extract_strided_slice %2 {offsets = [0, 64], sizes = [64, 32], strides = [1, 1]} : vector<64x96xf32> to vector<64x32xf32>
    %cst_3 = arith.constant dense<0.000000e+00> : vector<64x64xf32>
    %6 = tpu.matmul %3, %4, %cst_3 {dimension_numbers = #tpu.dot_dimension_numbers<[1], [1], [0], [0], [0, 0, 1, 0], [], []>} : vector<64x32xf32>, vector<64x32xf32>, vector<64x64xf32> -> vector<64x64xf32>
    %cst_4 = arith.constant 1.250000e-01 : f32
    %7 = vector.broadcast %cst_4 : f32 to vector<64x64xf32>
    %8 = arith.mulf %6, %7 : vector<64x64xf32>
    %c0_5 = arith.constant 0 : index
    %c0_6 = arith.constant 0 : index
    %9 = vector.load %arg4[%c0_5, %c0_6] : memref<64x64xf32, #tpu.memory_space<vmem>>, vector<64x64xf32>
    %10 = arith.addf %8, %9 : vector<64x64xf32>
    %cst_7 = arith.constant dense<0xFF800000> : vector<64xf32>
    %11 = vector.multi_reduction <maximumf>, %10, %cst_7 [1] : vector<64x64xf32> to vector<64xf32>
    %12 = vector.shape_cast %11 : vector<64xf32> to vector<64x1xf32>
    %13 = vector.broadcast %12 : vector<64x1xf32> to vector<64x64xf32>
    %14 = arith.subf %10, %13 : vector<64x64xf32>
    %15 = math.exp %14 : vector<64x64xf32>
    %cst_8 = arith.constant dense<0.000000e+00> : vector<64xf32>
    %16 = vector.multi_reduction <add>, %15, %cst_8 [1] : vector<64x64xf32> to vector<64xf32>
    %17 = vector.shape_cast %16 : vector<64xf32> to vector<64x1xf32>
    %18 = vector.broadcast %17 : vector<64x1xf32> to vector<64x64xf32>
    %19 = arith.divf %15, %18 : vector<64x64xf32>
    %c0_9 = arith.constant 0 : index
    %c0_10 = arith.constant 0 : index
    %20 = vector.load %arg3[%c0_9, %c0_10] : memref<64x64xf32, #tpu.memory_space<vmem>>, vector<64x64xf32>
    %21 = arith.addf %19, %20 : vector<64x64xf32>
    %c0_11 = arith.constant 0 : index
    %c0_12 = arith.constant 0 : index
    %22 = vector.load %arg5[%c0_11, %c0_12] : memref<64x64xf32, #tpu.memory_space<vmem>>, vector<64x64xf32>
    %cst_13 = arith.constant dense<0.000000e+00> : vector<64x64xf32>
    %23 = tpu.matmul %21, %22, %cst_13 {dimension_numbers = #tpu.dot_dimension_numbers<[1], [0], [0], [1], [0, 0, 1, 1], [], []>} : vector<64x64xf32>, vector<64x64xf32>, vector<64x64xf32> -> vector<64x64xf32>
    %c0_14 = arith.constant 0 : index
    %c0_15 = arith.constant 0 : index
    %24 = vector.load %arg6[%c0_14, %c0_15] : memref<64x64xf32, #tpu.memory_space<vmem>>, vector<64x64xf32>
    %25 = arith.addf %23, %24 : vector<64x64xf32>
    %cst_16 = arith.constant 0.000000e+00 : f32
    %26 = vector.broadcast %cst_16 : f32 to vector<64x64xf32>
    %27 = arith.maximumf %25, %26 : vector<64x64xf32>
    %c0_17 = arith.constant 0 : index
    %c0_18 = arith.constant 0 : index
    %28 = vector.load %arg7[%c0_17, %c0_18] : memref<1x64xf32, #tpu.memory_space<vmem>>, vector<1x64xf32>
    %29 = vector.broadcast %28 : vector<1x64xf32> to vector<64x64xf32>
    %30 = arith.mulf %27, %29 : vector<64x64xf32>
    %cst_19 = arith.constant dense<0.000000e+00> : vector<64xf32>
    %31 = vector.multi_reduction <add>, %30, %cst_19 [1] : vector<64x64xf32> to vector<64xf32>
    %32 = vector.shape_cast %31 : vector<64xf32> to vector<64x1xf32>
    %c0_20 = arith.constant 0 : index
    %33 = memref.load %arg8[%c0_20] : memref<1xf32, #tpu.memory_space<smem>>
    %34 = vector.broadcast %33 : f32 to vector<64x1xf32>
    %35 = arith.addf %32, %34 : vector<64x1xf32>
    %cst_21 = arith.constant 2.000000e+00 : f32
    %36 = vector.broadcast %cst_21 : f32 to vector<64x1xf32>
    %37 = arith.mulf %36, %35 : vector<64x1xf32>
    %38 = arith.mulf %37, %35 : vector<64x1xf32>
    %cst_22 = arith.constant 9.99999997E-7 : f32
    %39 = vector.broadcast %cst_22 : f32 to vector<64x1xf32>
    %40 = arith.addf %38, %39 : vector<64x1xf32>
    %cst_23 = arith.constant 1.000000e+00 : f32
    %41 = vector.broadcast %cst_23 : f32 to vector<64x1xf32>
    %42 = arith.divf %41, %40 : vector<64x1xf32>
    %c0_24 = arith.constant 0 : index
    %c0_25 = arith.constant 0 : index
    %43 = vector.load %arg9[%c0_24, %c0_25] : memref<64x64xf32, #tpu.memory_space<vmem>>, vector<64x64xf32>
    %cst_26 = arith.constant 0.000000e+00 : f32
    %44 = vector.broadcast %cst_26 : f32 to vector<64x64xf32>
    %45 = arith.subf %44, %43 : vector<64x64xf32>
    %46 = vector.broadcast %42 : vector<64x1xf32> to vector<64x64xf32>
    %47 = arith.mulf %45, %46 : vector<64x64xf32>
    %48 = math.exp %47 : vector<64x64xf32>
    %49 = arith.mulf %19, %48 : vector<64x64xf32>
    %c0_27 = arith.constant 0 : index
    %c0_28 = arith.constant 0 : index
    %50 = vector.load %arg4[%c0_27, %c0_28] : memref<64x64xf32, #tpu.memory_space<vmem>>, vector<64x64xf32>
    %51 = arith.addf %49, %50 : vector<64x64xf32>
    %52 = math.exp %51 : vector<64x64xf32>
    %cst_29 = arith.constant dense<0.000000e+00> : vector<64xf32>
    %53 = vector.multi_reduction <add>, %52, %cst_29 [1] : vector<64x64xf32> to vector<64xf32>
    %54 = vector.shape_cast %53 : vector<64xf32> to vector<64x1xf32>
    %55 = vector.broadcast %54 : vector<64x1xf32> to vector<64x64xf32>
    %56 = arith.divf %52, %55 : vector<64x64xf32>
    %cst_30 = arith.constant dense<0.000000e+00> : vector<64x32xf32>
    %57 = tpu.matmul %56, %5, %cst_30 {dimension_numbers = #tpu.dot_dimension_numbers<[1], [0], [0], [1], [0, 0, 1, 1], [], []>} : vector<64x64xf32>, vector<64x32xf32>, vector<64x32xf32> -> vector<64x32xf32>
    %c0_31 = arith.constant 0 : index
    %c0_32 = arith.constant 0 : index
    %58 = vector.load %arg10[%c0_31, %c0_32] : memref<1x32xf32, #tpu.memory_space<vmem>>, vector<1x32xf32>
    %59 = vector.broadcast %58 : vector<1x32xf32> to vector<64x32xf32>
    %60 = arith.addf %57, %59 : vector<64x32xf32>
    %c0_33 = arith.constant 0 : index
    %c0_34 = arith.constant 0 : index
    %61 = vector.load %arg11[%c0_33, %c0_34] : memref<64x32xf32, #tpu.memory_space<vmem>>, vector<64x32xf32>
    tpu.vector_store %arg11[%c0_33, %c0_34], %60 {strides = array<i32>} : memref<64x32xf32, #tpu.memory_space<vmem>>, vector<64x32xf32>,
    return
  }
  func.func @transform_0(%arg0: i32) -> (i32, i32) {
    %c0_i32 = arith.constant 0 : i32
    %c0_i32_0 = arith.constant 0 : i32
    return %arg0, %c0_i32 : i32, i32
  }
  func.func @transform_1(%arg0: i32) -> (i32, i32) {
    %c0_i32 = arith.constant 0 : i32
    %c0_i32_0 = arith.constant 0 : i32
    %c0_i32_1 = arith.constant 0 : i32
    return %c0_i32, %c0_i32_0 : i32, i32
  }
  func.func @transform_2(%arg0: i32) -> (i32, i32) {
    %c0_i32 = arith.constant 0 : i32
    %c0_i32_0 = arith.constant 0 : i32
    %c0_i32_1 = arith.constant 0 : i32
    return %c0_i32, %c0_i32_0 : i32, i32
  }
  func.func @transform_3(%arg0: i32) -> (i32, i32) {
    %c0_i32 = arith.constant 0 : i32
    %c0_i32_0 = arith.constant 0 : i32
    %c0_i32_1 = arith.constant 0 : i32
    return %c0_i32, %c0_i32_0 : i32, i32
  }
  func.func @transform_4(%arg0: i32) -> (i32, i32) {
    %c0_i32 = arith.constant 0 : i32
    %c0_i32_0 = arith.constant 0 : i32
    %c0_i32_1 = arith.constant 0 : i32
    return %c0_i32, %c0_i32_0 : i32, i32
  }
  func.func @transform_5(%arg0: i32) -> (i32, i32) {
    %c0_i32 = arith.constant 0 : i32
    %c0_i32_0 = arith.constant 0 : i32
    %c0_i32_1 = arith.constant 0 : i32
    return %c0_i32, %c0_i32_0 : i32, i32
  }
  func.func @transform_6(%arg0: i32) -> (i32, i32) {
    %c0_i32 = arith.constant 0 : i32
    %c0_i32_0 = arith.constant 0 : i32
    %c0_i32_1 = arith.constant 0 : i32
    return %c0_i32, %c0_i32_0 : i32, i32
  }
  func.func @transform_7(%arg0: i32) -> i32 {
    %c0_i32 = arith.constant 0 : i32
    %c0_i32_0 = arith.constant 0 : i32
    return %c0_i32 : i32
  }
  func.func @transform_8(%arg0: i32) -> (i32, i32) {
    %c0_i32 = arith.constant 0 : i32
    %c0_i32_0 = arith.constant 0 : i32
    %c0_i32_1 = arith.constant 0 : i32
    return %c0_i32, %c0_i32_0 : i32, i32
  }
  func.func @transform_9(%arg0: i32) -> (i32, i32) {
    %c0_i32 = arith.constant 0 : i32
    %c0_i32_0 = arith.constant 0 : i32
    %c0_i32_1 = arith.constant 0 : i32
    return %c0_i32, %c0_i32_0 : i32, i32
  }
  func.func @transform_10(%arg0: i32) -> (i32, i32) {
    %c0_i32 = arith.constant 0 : i32
    %c0_i32_0 = arith.constant 0 : i32
    return %arg0, %c0_i32 : i32, i32
  }
}

</mosaic_0001>

<llo_original>
// kernel: tpu_custom_call.1
$region0: #{tpu_custom_call.1}
  #allocation0 [shape = 'u32[]', space=smem, size = 0x4, offset = 0x4, fixed_abs, tag = 'smem constant byte address 0x4 - core index']
  #allocation1 [shape = 'u32[72,128]{1,0:T(1,128)}', space=vmem, size = 0x9000, scoped, tag = 'internal scratch']
  #allocation2 [shape = 'f32[1]{0:T(128)S(6)}', space=smem, size = 0x200, scoped, tag = 'scoped memory for tpu_custom_call.1']
  %s0 = inlined_call_operand.vmem [shape: f32[64,32], index: 0, kind: input, shape index: {}]
  %s1 = inlined_call_operand.vmem [shape: f32[32,96], index: 1, kind: input, shape index: {}]
  %s2 = inlined_call_operand.vmem [shape: f32[64,64], index: 2, kind: input, shape index: {}]
  %s3 = inlined_call_operand.hbm [shape: f32[64,64], index: 3, kind: input, shape index: {}]
  %s4 = inlined_call_operand.hbm [shape: f32[64,64], index: 4, kind: input, shape index: {}]
  %s5 = inlined_call_operand.hbm [shape: f32[64,64], index: 5, kind: input, shape index: {}]
  %s6 = inlined_call_operand.vmem [shape: f32[1,64], index: 6, kind: input, shape index: {}]
  %s7 = inlined_call_operand.<no memory space> [shape: f32[1], index: 7, kind: input, shape index: {}]
  %s8 = inlined_call_operand.hbm [shape: f32[64,64], index: 8, kind: input, shape index: {}]
  %s9 = inlined_call_operand.vmem [shape: f32[1,32], index: 9, kind: input, shape index: {}]
  %s10 = inlined_call_operand.vmem [shape: f32[64,32], index: 10, kind: output, shape index: {}]
  %s11 = sld [smem:[#allocation0]]
  $region66: #{tpu_custom_call.1} parent=0
    _
  %s13 = ssub.s32 1, %s11
  %s14 = scalar_select 0, %s13, %s11
  %15 = sst [smem:[#allocation2]] %s7
  $region1: #{tpu_custom_call.1} parent=0
    #allocation3 [shape = 'u8[32768]{0}', space=vmem, size = 0x8000, scoped, tag = 'input window, operand 3, single buffered']
    #allocation4 [shape = 's32[1]{0}', space=sflag, size = 0x4, scoped, tag = 'scoped memory for tpu_custom_call.1']
    #allocation5 [shape = 'u8[32768]{0}', space=vmem, size = 0x8000, scoped, tag = 'input window, operand 4, single buffered']
    #allocation6 [shape = 's32[1]{0}', space=sflag, size = 0x4, scoped, tag = 'scoped memory for tpu_custom_call.1']
    #allocation7 [shape = 'u8[32768]{0}', space=vmem, size = 0x8000, scoped, tag = 'input window, operand 5, single buffered']
    #allocation8 [shape = 'u8[32768]{0}', space=vmem, size = 0x8000, scoped, tag = 'input window, operand 8, single buffered']
    #allocation9 [shape = 's32[1]{0}', space=sflag, size = 0x4, scoped, tag = 'scoped memory for tpu_custom_call.1']
    %16 = vsyncpa [#allocation4], 0
    %17 = vsyncpa [#allocation6], 0
    %18 = vsyncpa [#allocation9], 0
    // Predicated region
    $region2: #{tpu_custom_call.1} parent=1 // pred_check
      _
    $region3: #{tpu_custom_call.1} parent=1 // pred_check_branch
      %20 = sbr.rel (0) target = $region5
    $region4: #{tpu_custom_call.1} parent=1 // pred_region
      _
    $region5: #{tpu_custom_call.1} parent=1 // pred_fallthru
      _
    // Predicated region
    $region6: #{tpu_custom_call.1} parent=1 // pred_check
      _
    $region7: #{tpu_custom_call.1} parent=1 // pred_check_branch
      %22 = sbr.rel (0) target = $region9
    $region8: #{tpu_custom_call.1} parent=1 // pred_region
      _
    $region9: #{tpu_custom_call.1} parent=1 // pred_fallthru
      _
    // Predicated region
    $region10: #{tpu_custom_call.1} parent=1 // pred_check
      _
    $region11: #{tpu_custom_call.1} parent=1 // pred_check_branch
      %24 = sbr.rel (0) target = $region13
    $region12: #{tpu_custom_call.1} parent=1 // pred_region
      _
    $region13: #{tpu_custom_call.1} parent=1 // pred_fallthru
      _
    // Predicated region
    $region14: #{tpu_custom_call.1} parent=1 // pred_check
      _
    $region15: #{tpu_custom_call.1} parent=1 // pred_check_branch
      %26 = sbr.rel (0) target = $region17
    $region16: #{tpu_custom_call.1} parent=1 // pred_region
      %28 = vsyncadd [#allocation4], 0
      %s29 = sshll.u32 %s3, 4
      %s30 = int_to_ptr.hbm [resolvable:$true] %s29
      %s31 = sshll.u32 [#allocation3], 4
      %s32 = int_to_ptr.vmem [resolvable:$true] %s31
      %37 = dma.hbm_to_vmem [thread:$0]  %s30, 1024, %s32, [#allocation4], 128, 128, 8
    $region17: #{tpu_custom_call.1} parent=1 // pred_fallthru
      _
    // Predicated region
    $region18: #{tpu_custom_call.1} parent=1 // pred_check
      _
    $region19: #{tpu_custom_call.1} parent=1 // pred_check_branch
      %39 = sbr.rel (0) target = $region21
    $region20: #{tpu_custom_call.1} parent=1 // pred_region
      %41 = vsyncadd [#allocation6], 0
      %s42 = sshll.u32 %s4, 4
      %s43 = int_to_ptr.hbm [resolvable:$true] %s42
      %s44 = sshll.u32 [#allocation5], 4
      %s45 = int_to_ptr.vmem [resolvable:$true] %s44
      %50 = dma.hbm_to_vmem [thread:$0]  %s43, 1024, %s45, [#allocation6], 128, 128, 8
    $region21: #{tpu_custom_call.1} parent=1 // pred_fallthru
      _
    // Predicated region
    $region22: #{tpu_custom_call.1} parent=1 // pred_check
      _
    $region23: #{tpu_custom_call.1} parent=1 // pred_check_branch
      %52 = sbr.rel (0) target = $region25
    $region24: #{tpu_custom_call.1} parent=1 // pred_region
      %54 = vsyncadd [#allocation6], 0
      %s55 = sshll.u32 %s5, 4
      %s56 = int_to_ptr.hbm [resolvable:$true] %s55
      %s57 = sshll.u32 [#allocation7], 4
      %s58 = int_to_ptr.vmem [resolvable:$true] %s57
      %63 = dma.hbm_to_vmem [thread:$0]  %s56, 1024, %s58, [#allocation6], 128, 128, 8
    $region25: #{tpu_custom_call.1} parent=1 // pred_fallthru
      _
    // Predicated region
    $region26: #{tpu_custom_call.1} parent=1 // pred_check
      _
    $region27: #{tpu_custom_call.1} parent=1 // pred_check_branch
      %65 = sbr.rel (0) target = $region29
    $region28: #{tpu_custom_call.1} parent=1 // pred_region
      _
    $region29: #{tpu_custom_call.1} parent=1 // pred_fallthru
      _
    // Predicated region
    $region30: #{tpu_custom_call.1} parent=1 // pred_check
      _
    $region31: #{tpu_custom_call.1} parent=1 // pred_check_branch
      %67 = sbr.rel (0) target = $region33
    $region32: #{tpu_custom_call.1} parent=1 // pred_region
      _
    $region33: #{tpu_custom_call.1} parent=1 // pred_fallthru
      _
    // Predicated region
    $region34: #{tpu_custom_call.1} parent=1 // pred_check
      _
    $region35: #{tpu_custom_call.1} parent=1 // pred_check_branch
      %69 = sbr.rel (0) target = $region37
    $region36: #{tpu_custom_call.1} parent=1 // pred_region
      %71 = vsyncadd [#allocation9], 0
      %s72 = sshll.u32 %s8, 4
      %s73 = int_to_ptr.hbm [resolvable:$true] %s72
      %s74 = sshll.u32 [#allocation8], 4
      %s75 = int_to_ptr.vmem [resolvable:$true] %s74
      %80 = dma.hbm_to_vmem [thread:$0]  %s73, 1024, %s75, [#allocation9], 128, 128, 8
    $region37: #{tpu_custom_call.1} parent=1 // pred_fallthru
      _
    // Predicated region
    $region38: #{tpu_custom_call.1} parent=1 // pred_check
      _
    $region39: #{tpu_custom_call.1} parent=1 // pred_check_branch
      %82 = sbr.rel (0) target = $region41
    $region40: #{tpu_custom_call.1} parent=1 // pred_region
      _
    $region41: #{tpu_custom_call.1} parent=1 // pred_fallthru
      _
    // Predicated region
    $region42: #{tpu_custom_call.1} parent=1 // pred_check
      _
    $region43: #{tpu_custom_call.1} parent=1 // pred_check_branch
      %84 = sbr.rel (0) target = $region45
    $region44: #{tpu_custom_call.1} parent=1 // pred_region
      %86 = dma.done [#allocation4], 1024
    $region45: #{tpu_custom_call.1} parent=1 // pred_fallthru
      _
    // Predicated region
    $region46: #{tpu_custom_call.1} parent=1 // pred_check
      _
    $region47: #{tpu_custom_call.1} parent=1 // pred_check_branch
      %88 = sbr.rel (0) target = $region49
    $region48: #{tpu_custom_call.1} parent=1 // pred_region
      %90 = dma.done [#allocation6], 1024
    $region49: #{tpu_custom_call.1} parent=1 // pred_fallthru
      _
    // Predicated region
    $region50: #{tpu_custom_call.1} parent=1 // pred_check
      _
    $region51: #{tpu_custom_call.1} parent=1 // pred_check_branch
      %92 = sbr.rel (0) target = $region53
    $region52: #{tpu_custom_call.1} parent=1 // pred_region
      %94 = dma.done [#allocation6], 1024
    $region53: #{tpu_custom_call.1} parent=1 // pred_fallthru
      _
    // Predicated region
    $region54: #{tpu_custom_call.1} parent=1 // pred_check
      _
    $region55: #{tpu_custom_call.1} parent=1 // pred_check_branch
      %96 = sbr.rel (0) target = $region57
    $region56: #{tpu_custom_call.1} parent=1 // pred_region
      %98 = dma.done [#allocation9], 1024
    $region57: #{tpu_custom_call.1} parent=1 // pred_fallthru
      _
    %v99 = vld [vmem:[%s0] sm:$0xff]
    %v100 = vld [vmem:[%s0 + $0x8] sm:$0xff]
    %v101 = vld [vmem:[%s0 + $0x10] sm:$0xff]
    %v102 = vld [vmem:[%s0 + $0x18] sm:$0xff]
    %v103 = vld [vmem:[%s0 + $0x20] sm:$0xff]
    %v104 = vld [vmem:[%s0 + $0x28] sm:$0xff]
    %v105 = vld [vmem:[%s0 + $0x30] sm:$0xff]
    %v106 = vld [vmem:[%s0 + $0x38] sm:$0xff]
    %v107 = vld [vmem:[%s1] sm:$0xff]
    %v108 = vld [vmem:[%s1 + $0x8] sm:$0xff]
    %v109 = vld [vmem:[%s1 + $0x10] sm:$0xff]
    %v110 = vld [vmem:[%s1 + $0x18] sm:$0xff]
    %vm111 = vcmask 261120
    %v113 = vsel %vm111, %v99, 0
    %v116 = vsel %vm111, %v100, 0
    %v119 = vsel %vm111, %v101, 0
    %v122 = vsel %vm111, %v102, 0
    %v125 = vsel %vm111, %v103, 0
    %v128 = vsel %vm111, %v104, 0
    %v131 = vsel %vm111, %v105, 0
    %v134 = vsel %vm111, %v106, 0
    %136 = vmatpush.msra.mxu0 0.0
    %137 = vmatpush.msra.mxu0 0.0
    %138 = vmatpush.msra.mxu0 0.0
    %139 = vmatpush.msra.mxu0 0.0
    %140 = vmatpush.msra.mxu0 0.0
    %141 = vmatpush.msra.mxu0 0.0
    %142 = vmatpush.msra.mxu0 0.0
    %143 = vmatpush.msra.mxu0 0.0
    %144 = vmatpush.msra.mxu0 0.0
    %145 = vmatpush.msra.mxu0 0.0
    %146 = vmatpush.msra.mxu0 0.0
    %147 = vmatpush.msra.mxu0 0.0
    %148 = vmatpush.msra.mxu0 %v110
    %149 = vmatpush.msra.mxu0 %v109
    %150 = vmatpush.msra.mxu0 %v108
    %151 = vmatpush.msra.mxu0 %v107
    %152 = vmatmul.f32.gmra.mxu0 %v113
    %v153 = vpop.f32.mrf.mxu0
    %v154 = vadd.f32 0.0, %v153
    %155 = vmatmul.f32.gmra.mxu0 %v116
    %v156 = vpop.f32.mrf.mxu0
    %v157 = vadd.f32 0.0, %v156
    %158 = vmatmul.f32.gmra.mxu0 %v119
    %v159 = vpop.f32.mrf.mxu0
    %v160 = vadd.f32 0.0, %v159
    %161 = vmatmul.f32.gmra.mxu0 %v122
    %v162 = vpop.f32.mrf.mxu0
    %v163 = vadd.f32 0.0, %v162
    %164 = vmatmul.f32.gmra.mxu0 %v125
    %v165 = vpop.f32.mrf.mxu0
    %v166 = vadd.f32 0.0, %v165
    %167 = vmatmul.f32.gmra.mxu0 %v128
    %v168 = vpop.f32.mrf.mxu0
    %v169 = vadd.f32 0.0, %v168
    %170 = vmatmul.f32.gmra.mxu0 %v131
    %v171 = vpop.f32.mrf.mxu0
    %v172 = vadd.f32 0.0, %v171
    %173 = vmatmul.f32.gmra.mxu0 %v134
    %v174 = vpop.f32.mrf.mxu0
    %v175 = vadd.f32 0.0, %v174
    %176 = vdwg.mxu0
    %185 = vrot.lane.b32.xlu0 %v154, 96
    %v186 = vpop.permute.xlu0 %185
    %187 = vrot.lane.b32.xlu0 %v157, 96
    %v188 = vpop.permute.xlu0 %187
    %189 = vrot.lane.b32.xlu0 %v160, 96
    %v190 = vpop.permute.xlu0 %189
    %191 = vrot.lane.b32.xlu0 %v163, 96
    %v192 = vpop.permute.xlu0 %191
    %193 = vrot.lane.b32.xlu0 %v166, 96
    %v194 = vpop.permute.xlu0 %193
    %195 = vrot.lane.b32.xlu0 %v169, 96
    %v196 = vpop.permute.xlu0 %195
    %197 = vrot.lane.b32.xlu0 %v172, 96
    %v198 = vpop.permute.xlu0 %197
    %199 = vrot.lane.b32.xlu0 %v175, 96
    %v200 = vpop.permute.xlu0 %199
    %v201 = vsel %vm111, %v154, 0
    %v203 = vsel %vm111, %v157, 0
    %v205 = vsel %vm111, %v160, 0
    %v207 = vsel %vm111, %v163, 0
    %v209 = vsel %vm111, %v166, 0
    %v211 = vsel %vm111, %v169, 0
    %v213 = vsel %vm111, %v172, 0
    %v215 = vsel %vm111, %v175, 0
    %v217 = vsel %vm111, %v186, 0
    %v219 = vsel %vm111, %v188, 0
    %v221 = vsel %vm111, %v190, 0
    %v223 = vsel %vm111, %v192, 0
    %v225 = vsel %vm111, %v194, 0
    %v227 = vsel %vm111, %v196, 0
    %v229 = vsel %vm111, %v198, 0
    %v231 = vsel %vm111, %v200, 0
    %233 = vmatpush.xpose.msra.mxu0 0.0
    %234 = vmatpush.xpose.msra.mxu0 0.0
    %235 = vmatpush.xpose.msra.mxu0 0.0
    %236 = vmatpush.xpose.msra.mxu0 0.0
    %237 = vmatpush.xpose.msra.mxu0 0.0
    %238 = vmatpush.xpose.msra.mxu0 0.0
    %239 = vmatpush.xpose.msra.mxu0 0.0
    %240 = vmatpush.xpose.msra.mxu0 0.0
    %241 = vmatpush.xpose.msra.mxu0 %v231
    %242 = vmatpush.xpose.msra.mxu0 %v229
    %243 = vmatpush.xpose.msra.mxu0 %v227
    %244 = vmatpush.xpose.msra.mxu0 %v225
    %245 = vmatpush.xpose.msra.mxu0 %v223
    %246 = vmatpush.xpose.msra.mxu0 %v221
    %247 = vmatpush.xpose.msra.mxu0 %v219
    %248 = vmatpush.xpose.msra.mxu0 %v217
    %249 = vmatmul.f32.gmra.mxu0 %v201
    %v250 = vpop.f32.mrf.mxu0
    %v251 = vadd.f32 0.0, %v250
    %252 = vmatmul.f32.gmra.mxu0 %v203
    %v253 = vpop.f32.mrf.mxu0
    %v254 = vadd.f32 0.0, %v253
    %255 = vmatmul.f32.gmra.mxu0 %v205
    %v256 = vpop.f32.mrf.mxu0
    %v257 = vadd.f32 0.0, %v256
    %258 = vmatmul.f32.gmra.mxu0 %v207
    %v259 = vpop.f32.mrf.mxu0
    %v260 = vadd.f32 0.0, %v259
    %261 = vmatmul.f32.gmra.mxu0 %v209
    %v262 = vpop.f32.mrf.mxu0
    %v263 = vadd.f32 0.0, %v262
    %264 = vmatmul.f32.gmra.mxu0 %v211
    %v265 = vpop.f32.mrf.mxu0
    %v266 = vadd.f32 0.0, %v265
    %267 = vmatmul.f32.gmra.mxu0 %v213
    %v268 = vpop.f32.mrf.mxu0
    %v269 = vadd.f32 0.0, %v268
    %270 = vmatmul.f32.gmra.mxu0 %v215
    %v271 = vpop.f32.mrf.mxu0
    %v272 = vadd.f32 0.0, %v271
    %273 = vdwg.mxu0
    %v274 = vmul.f32 %v251, 0.125
    %v275 = vmul.f32 %v254, 0.125
    %v276 = vmul.f32 %v257, 0.125
    %v277 = vmul.f32 %v260, 0.125
    %v278 = vmul.f32 %v263, 0.125
    %v279 = vmul.f32 %v266, 0.125
    %v280 = vmul.f32 %v269, 0.125
    %v281 = vmul.f32 %v272, 0.125
    %v282 = vld [vmem:[#allocation3] sm:$0xff]
    %v283 = vld [vmem:[#allocation3 + $0x8] sm:$0xff]
    %v284 = vld [vmem:[#allocation3 + $0x10] sm:$0xff]
    %v285 = vld [vmem:[#allocation3 + $0x18] sm:$0xff]
    %v286 = vld [vmem:[#allocation3 + $0x20] sm:$0xff]
    %v287 = vld [vmem:[#allocation3 + $0x28] sm:$0xff]
    %v288 = vld [vmem:[#allocation3 + $0x30] sm:$0xff]
    %v289 = vld [vmem:[#allocation3 + $0x38] sm:$0xff]
    %v290 = vadd.f32 %v274, %v282
    %v291 = vadd.f32 %v275, %v283
    %v292 = vadd.f32 %v276, %v284
    %v293 = vadd.f32 %v277, %v285
    %v294 = vadd.f32 %v278, %v286
    %v295 = vadd.f32 %v279, %v287
    %v296 = vadd.f32 %v280, %v288
    %v297 = vadd.f32 %v281, %v289
    %vm298 = vcmask 523264
    %v299 = vsel %vm298, %v290, -inf
    %300 = vmax.xlane.f32.xlu0 %v299
    %v301 = vpop.xlane.xlu0 %300
    %v302 = vsel %vm298, %v291, -inf
    %303 = vmax.xlane.f32.xlu0 %v302
    %v304 = vpop.xlane.xlu0 %303
    %v305 = vsel %vm298, %v292, -inf
    %306 = vmax.xlane.f32.xlu0 %v305
    %v307 = vpop.xlane.xlu0 %306
    %v308 = vsel %vm298, %v293, -inf
    %309 = vmax.xlane.f32.xlu0 %v308
    %v310 = vpop.xlane.xlu0 %309
    %v311 = vsel %vm298, %v294, -inf
    %312 = vmax.xlane.f32.xlu0 %v311
    %v313 = vpop.xlane.xlu0 %312
    %v314 = vsel %vm298, %v295, -inf
    %315 = vmax.xlane.f32.xlu0 %v314
    %v316 = vpop.xlane.xlu0 %315
    %v317 = vsel %vm298, %v296, -inf
    %318 = vmax.xlane.f32.xlu0 %v317
    %v319 = vpop.xlane.xlu0 %318
    %v320 = vsel %vm298, %v297, -inf
    %321 = vmax.xlane.f32.xlu0 %v320
    %v322 = vpop.xlane.xlu0 %321
    %v323 = vsub.f32 %v290, %v301
    %v324 = vsub.f32 %v291, %v304
    %v325 = vsub.f32 %v292, %v307
    %v326 = vsub.f32 %v293, %v310
    %v327 = vsub.f32 %v294, %v313
    %v328 = vsub.f32 %v295, %v316
    %v329 = vsub.f32 %v296, %v319
    %v330 = vsub.f32 %v297, %v322
    %v331 = vmul.f32 %v323, 1.442695
    %v332 = vpow.pop %v331
    %v333 = vmul.f32 %v324, 1.442695
    %v334 = vpow.pop %v333
    %v335 = vmul.f32 %v325, 1.442695
    %v336 = vpow.pop %v335
    %v337 = vmul.f32 %v326, 1.442695
    %v338 = vpow.pop %v337
    %v339 = vmul.f32 %v327, 1.442695
    %v340 = vpow.pop %v339
    %v341 = vmul.f32 %v328, 1.442695
    %v342 = vpow.pop %v341
    %v343 = vmul.f32 %v329, 1.442695
    %v344 = vpow.pop %v343
    %v345 = vmul.f32 %v330, 1.442695
    %v346 = vpow.pop %v345
    %v347 = vsel %vm298, %v332, 0.0
    %348 = vadd.xlane.f32.xlu0 %v347
    %v349 = vpop.xlane.xlu0 %348
    %v350 = vsel %vm298, %v334, 0.0
    %351 = vadd.xlane.f32.xlu0 %v350
    %v352 = vpop.xlane.xlu0 %351
    %v353 = vsel %vm298, %v336, 0.0
    %354 = vadd.xlane.f32.xlu0 %v353
    %v355 = vpop.xlane.xlu0 %354
    %v356 = vsel %vm298, %v338, 0.0
    %357 = vadd.xlane.f32.xlu0 %v356
    %v358 = vpop.xlane.xlu0 %357
    %v359 = vsel %vm298, %v340, 0.0
    %360 = vadd.xlane.f32.xlu0 %v359
    %v361 = vpop.xlane.xlu0 %360
    %v362 = vsel %vm298, %v342, 0.0
    %363 = vadd.xlane.f32.xlu0 %v362
    %v364 = vpop.xlane.xlu0 %363
    %v365 = vsel %vm298, %v344, 0.0
    %366 = vadd.xlane.f32.xlu0 %v365
    %v367 = vpop.xlane.xlu0 %366
    %v368 = vsel %vm298, %v346, 0.0
    %369 = vadd.xlane.f32.xlu0 %v368
    %v370 = vpop.xlane.xlu0 %369
    %v371 = vrcp.pop %v349
    %v372 = vmul.f32 %v349, %v371
    %v373 = vsub.f32 1.0, %v372
    %v374 = vmul.f32 %v371, %v373
    %v375 = vadd.f32 %v371, %v374
    %vm376 = vweird.f32 %v349
    %vm377 = vweird.f32 %v371
    %vm378 = vmor %vm376, %vm377
    %v379 = vsel %vm378, %v371, %v375
    %v380 = vand.u32 2147483647, %v349
    %vm381 = vcmp.eq.f32.partialorder %v380, 8.507059e+37
    %v382 = vand.u32 %v349, 2147483648
    %v383 = vor.u32 1.1754944e-38, %v382
    %v384 = vsel %vm381, %v383, %v379
    %v385 = vmul.f32 %v332, %v384
    %v386 = vrcp.pop %v352
    %v387 = vmul.f32 %v352, %v386
    %v388 = vsub.f32 1.0, %v387
    %v389 = vmul.f32 %v386, %v388
    %v390 = vadd.f32 %v386, %v389
    %vm391 = vweird.f32 %v352
    %vm392 = vweird.f32 %v386
    %vm393 = vmor %vm391, %vm392
    %v394 = vsel %vm393, %v386, %v390
    %v395 = vand.u32 2147483647, %v352
    %vm396 = vcmp.eq.f32.partialorder %v395, 8.507059e+37
    %v397 = vand.u32 %v352, 2147483648
    %v398 = vor.u32 1.1754944e-38, %v397
    %v399 = vsel %vm396, %v398, %v394
    %v400 = vmul.f32 %v334, %v399
    %v401 = vrcp.pop %v355
    %v402 = vmul.f32 %v355, %v401
    %v403 = vsub.f32 1.0, %v402
    %v404 = vmul.f32 %v401, %v403
    %v405 = vadd.f32 %v401, %v404
    %vm406 = vweird.f32 %v355
    %vm407 = vweird.f32 %v401
    %vm408 = vmor %vm406, %vm407
    %v409 = vsel %vm408, %v401, %v405
    %v410 = vand.u32 2147483647, %v355
    %vm411 = vcmp.eq.f32.partialorder %v410, 8.507059e+37
    %v412 = vand.u32 %v355, 2147483648
    %v413 = vor.u32 1.1754944e-38, %v412
    %v414 = vsel %vm411, %v413, %v409
    %v415 = vmul.f32 %v336, %v414
    %v416 = vrcp.pop %v358
    %v417 = vmul.f32 %v358, %v416
    %v418 = vsub.f32 1.0, %v417
    %v419 = vmul.f32 %v416, %v418
    %v420 = vadd.f32 %v416, %v419
    %vm421 = vweird.f32 %v358
    %vm422 = vweird.f32 %v416
    %vm423 = vmor %vm421, %vm422
    %v424 = vsel %vm423, %v416, %v420
    %v425 = vand.u32 2147483647, %v358
    %vm426 = vcmp.eq.f32.partialorder %v425, 8.507059e+37
    %v427 = vand.u32 %v358, 2147483648
    %v428 = vor.u32 1.1754944e-38, %v427
    %v429 = vsel %vm426, %v428, %v424
    %v430 = vmul.f32 %v338, %v429
    %v431 = vrcp.pop %v361
    %v432 = vmul.f32 %v361, %v431
    %v433 = vsub.f32 1.0, %v432
    %v434 = vmul.f32 %v431, %v433
    %v435 = vadd.f32 %v431, %v434
    %vm436 = vweird.f32 %v361
    %vm437 = vweird.f32 %v431
    %vm438 = vmor %vm436, %vm437
    %v439 = vsel %vm438, %v431, %v435
    %v440 = vand.u32 2147483647, %v361
    %vm441 = vcmp.eq.f32.partialorder %v440, 8.507059e+37
    %v442 = vand.u32 %v361, 2147483648
    %v443 = vor.u32 1.1754944e-38, %v442
    %v444 = vsel %vm441, %v443, %v439
    %v445 = vmul.f32 %v340, %v444
    %v446 = vrcp.pop %v364
    %v447 = vmul.f32 %v364, %v446
    %v448 = vsub.f32 1.0, %v447
    %v449 = vmul.f32 %v446, %v448
    %v450 = vadd.f32 %v446, %v449
    %vm451 = vweird.f32 %v364
    %vm452 = vweird.f32 %v446
    %vm453 = vmor %vm451, %vm452
    %v454 = vsel %vm453, %v446, %v450
    %v455 = vand.u32 2147483647, %v364
    %vm456 = vcmp.eq.f32.partialorder %v455, 8.507059e+37
    %v457 = vand.u32 %v364, 2147483648
    %v458 = vor.u32 1.1754944e-38, %v457
    %v459 = vsel %vm456, %v458, %v454
    %v460 = vmul.f32 %v342, %v459
    %v461 = vrcp.pop %v367
    %v462 = vmul.f32 %v367, %v461
    %v463 = vsub.f32 1.0, %v462
    %v464 = vmul.f32 %v461, %v463
    %v465 = vadd.f32 %v461, %v464
    %vm466 = vweird.f32 %v367
    %vm467 = vweird.f32 %v461
    %vm468 = vmor %vm466, %vm467
    %v469 = vsel %vm468, %v461, %v465
    %v470 = vand.u32 2147483647, %v367
    %vm471 = vcmp.eq.f32.partialorder %v470, 8.507059e+37
    %v472 = vand.u32 %v367, 2147483648
    %v473 = vor.u32 1.1754944e-38, %v472
    %v474 = vsel %vm471, %v473, %v469
    %v475 = vmul.f32 %v344, %v474
    %v476 = vrcp.pop %v370
    %v477 = vmul.f32 %v370, %v476
    %v478 = vsub.f32 1.0, %v477
    %v479 = vmul.f32 %v476, %v478
    %v480 = vadd.f32 %v476, %v479
    %vm481 = vweird.f32 %v370
    %vm482 = vweird.f32 %v476
    %vm483 = vmor %vm481, %vm482
    %v484 = vsel %vm483, %v476, %v480
    %v485 = vand.u32 2147483647, %v370
    %vm486 = vcmp.eq.f32.partialorder %v485, 8.507059e+37
    %v487 = vand.u32 %v370, 2147483648
    %v488 = vor.u32 1.1754944e-38, %v487
    %v489 = vsel %vm486, %v488, %v484
    %v490 = vmul.f32 %v346, %v489
    %v491 = vld [vmem:[%s2] sm:$0xff]
    %v492 = vld [vmem:[%s2 + $0x8] sm:$0xff]
    %v493 = vld [vmem:[%s2 + $0x10] sm:$0xff]
    %v494 = vld [vmem:[%s2 + $0x18] sm:$0xff]
    %v495 = vld [vmem:[%s2 + $0x20] sm:$0xff]
    %v496 = vld [vmem:[%s2 + $0x28] sm:$0xff]
    %v497 = vld [vmem:[%s2 + $0x30] sm:$0xff]
    %v498 = vld [vmem:[%s2 + $0x38] sm:$0xff]
    %v499 = vadd.f32 %v385, %v491
    %v500 = vadd.f32 %v400, %v492
    %v501 = vadd.f32 %v415, %v493
    %v502 = vadd.f32 %v430, %v494
    %v503 = vadd.f32 %v445, %v495
    %v504 = vadd.f32 %v460, %v496
    %v505 = vadd.f32 %v475, %v497
    %v506 = vadd.f32 %v490, %v498
    %v507 = vld [vmem:[#allocation5] sm:$0xff]
    %v508 = vld [vmem:[#allocation5 + $0x8] sm:$0xff]
    %v509 = vld [vmem:[#allocation5 + $0x10] sm:$0xff]
    %v510 = vld [vmem:[#allocation5 + $0x18] sm:$0xff]
    %v511 = vld [vmem:[#allocation5 + $0x20] sm:$0xff]
    %v512 = vld [vmem:[#allocation5 + $0x28] sm:$0xff]
    %v513 = vld [vmem:[#allocation5 + $0x30] sm:$0xff]
    %v514 = vld [vmem:[#allocation5 + $0x38] sm:$0xff]
    %v515 = vld [vmem:[#allocation7] sm:$0xff]
    %v516 = vld [vmem:[#allocation7 + $0x8] sm:$0xff]
    %v517 = vld [vmem:[#allocation7 + $0x10] sm:$0xff]
    %v518 = vld [vmem:[#allocation7 + $0x18] sm:$0xff]
    %v519 = vld [vmem:[#allocation7 + $0x20] sm:$0xff]
    %v520 = vld [vmem:[#allocation7 + $0x28] sm:$0xff]
    %v521 = vld [vmem:[#allocation7 + $0x30] sm:$0xff]
    %v522 = vld [vmem:[#allocation7 + $0x38] sm:$0xff]
    %v524 = vsel %vm298, %v499, 0
    %v527 = vsel %vm298, %v500, 0
    %v530 = vsel %vm298, %v501, 0
    %v533 = vsel %vm298, %v502, 0
    %v536 = vsel %vm298, %v503, 0
    %v539 = vsel %vm298, %v504, 0
    %v542 = vsel %vm298, %v505, 0
    %v545 = vsel %vm298, %v506, 0
    %547 = vmatpush.msra.mxu0 0.0
    %548 = vmatpush.msra.mxu0 0.0
    %549 = vmatpush.msra.mxu0 0.0
    %550 = vmatpush.msra.mxu0 0.0
    %551 = vmatpush.msra.mxu0 0.0
    %552 = vmatpush.msra.mxu0 0.0
    %553 = vmatpush.msra.mxu0 0.0
    %554 = vmatpush.msra.mxu0 0.0
    %555 = vmatpush.msra.mxu0 %v514
    %556 = vmatpush.msra.mxu0 %v513
    %557 = vmatpush.msra.mxu0 %v512
    %558 = vmatpush.msra.mxu0 %v511
    %559 = vmatpush.msra.mxu0 %v510
    %560 = vmatpush.msra.mxu0 %v509
    %561 = vmatpush.msra.mxu0 %v508
    %562 = vmatpush.msra.mxu0 %v507
    %563 = vmatmul.f32.gmra.mxu0 %v524
    %v564 = vpop.f32.mrf.mxu0
    %v565 = vadd.f32 %v515, %v564
    %566 = vmatmul.f32.gmra.mxu0 %v527
    %v567 = vpop.f32.mrf.mxu0
    %v568 = vadd.f32 %v516, %v567
    %569 = vmatmul.f32.gmra.mxu0 %v530
    %v570 = vpop.f32.mrf.mxu0
    %v571 = vadd.f32 %v517, %v570
    %572 = vmatmul.f32.gmra.mxu0 %v533
    %v573 = vpop.f32.mrf.mxu0
    %v574 = vadd.f32 %v518, %v573
    %575 = vmatmul.f32.gmra.mxu0 %v536
    %v576 = vpop.f32.mrf.mxu0
    %v577 = vadd.f32 %v519, %v576
    %578 = vmatmul.f32.gmra.mxu0 %v539
    %v579 = vpop.f32.mrf.mxu0
    %v580 = vadd.f32 %v520, %v579
    %581 = vmatmul.f32.gmra.mxu0 %v542
    %v582 = vpop.f32.mrf.mxu0
    %v583 = vadd.f32 %v521, %v582
    %584 = vmatmul.f32.gmra.mxu0 %v545
    %v585 = vpop.f32.mrf.mxu0
    %v586 = vadd.f32 %v522, %v585
    %587 = vdwg.mxu0
    %v588 = vmax.f32 %v565, 0.0
    %v589 = vmax.f32 %v568, 0.0
    %v590 = vmax.f32 %v571, 0.0
    %v591 = vmax.f32 %v574, 0.0
    %v592 = vmax.f32 %v577, 0.0
    %v593 = vmax.f32 %v580, 0.0
    %v594 = vmax.f32 %v583, 0.0
    %v595 = vmax.f32 %v586, 0.0
    %v596 = vld [vmem:[%s6] sm:$0x1]
    %v598 = vperm.slane %v596, 0
    %v600 = vmul.f32 %v588, %v598
    %v601 = vmul.f32 %v589, %v598
    %v602 = vmul.f32 %v590, %v598
    %v603 = vmul.f32 %v591, %v598
    %v604 = vmul.f32 %v592, %v598
    %v605 = vmul.f32 %v593, %v598
    %v606 = vmul.f32 %v594, %v598
    %v607 = vmul.f32 %v595, %v598
    %v608 = vsel %vm298, %v600, 0.0
    %609 = vadd.xlane.f32.xlu0 %v608
    %v610 = vpop.xlane.xlu0 %609
    %v611 = vsel %vm298, %v601, 0.0
    %612 = vadd.xlane.f32.xlu0 %v611
    %v613 = vpop.xlane.xlu0 %612
    %v614 = vsel %vm298, %v602, 0.0
    %615 = vadd.xlane.f32.xlu0 %v614
    %v616 = vpop.xlane.xlu0 %615
    %v617 = vsel %vm298, %v603, 0.0
    %618 = vadd.xlane.f32.xlu0 %v617
    %v619 = vpop.xlane.xlu0 %618
    %v620 = vsel %vm298, %v604, 0.0
    %621 = vadd.xlane.f32.xlu0 %v620
    %v622 = vpop.xlane.xlu0 %621
    %v623 = vsel %vm298, %v605, 0.0
    %624 = vadd.xlane.f32.xlu0 %v623
    %v625 = vpop.xlane.xlu0 %624
    %v626 = vsel %vm298, %v606, 0.0
    %627 = vadd.xlane.f32.xlu0 %v626
    %v628 = vpop.xlane.xlu0 %627
    %v629 = vsel %vm298, %v607, 0.0
    %630 = vadd.xlane.f32.xlu0 %v629
    %v631 = vpop.xlane.xlu0 %630
    %s632 = sld [smem:[#allocation2]]
    %v633 = vstv %s632
    %v634 = vadd.f32 %v610, %v633
    %v635 = vadd.f32 %v613, %v633
    %v636 = vadd.f32 %v616, %v633
    %v637 = vadd.f32 %v619, %v633
    %v638 = vadd.f32 %v622, %v633
    %v639 = vadd.f32 %v625, %v633
    %v640 = vadd.f32 %v628, %v633
    %v641 = vadd.f32 %v631, %v633
    %v642 = vmul.f32 %v634, 2.0
    %v643 = vmul.f32 %v635, 2.0
    %v644 = vmul.f32 %v636, 2.0
    %v645 = vmul.f32 %v637, 2.0
    %v646 = vmul.f32 %v638, 2.0
    %v647 = vmul.f32 %v639, 2.0
    %v648 = vmul.f32 %v640, 2.0
    %v649 = vmul.f32 %v641, 2.0
    %v650 = vmul.f32 %v642, %v634
    %v651 = vmul.f32 %v643, %v635
    %v652 = vmul.f32 %v644, %v636
    %v653 = vmul.f32 %v645, %v637
    %v654 = vmul.f32 %v646, %v638
    %v655 = vmul.f32 %v647, %v639
    %v656 = vmul.f32 %v648, %v640
    %v657 = vmul.f32 %v649, %v641
    %v658 = vadd.f32 %v650, 1e-06
    %v659 = vadd.f32 %v651, 1e-06
    %v660 = vadd.f32 %v652, 1e-06
    %v661 = vadd.f32 %v653, 1e-06
    %v662 = vadd.f32 %v654, 1e-06
    %v663 = vadd.f32 %v655, 1e-06
    %v664 = vadd.f32 %v656, 1e-06
    %v665 = vadd.f32 %v657, 1e-06
    %v666 = vrcp.pop %v658
    %v667 = vmul.f32 %v658, %v666
    %v668 = vsub.f32 1.0, %v667
    %v669 = vmul.f32 %v666, %v668
    %v670 = vadd.f32 %v666, %v669
    %vm671 = vweird.f32 %v658
    %vm672 = vweird.f32 %v666
    %vm673 = vmor %vm671, %vm672
    %v674 = vsel %vm673, %v666, %v670
    %v675 = vand.u32 2147483647, %v658
    %vm676 = vcmp.eq.f32.partialorder %v675, 8.507059e+37
    %v677 = vand.u32 %v658, 2147483648
    %v678 = vor.u32 1.1754944e-38, %v677
    %v679 = vsel %vm676, %v678, %v674
    %v680 = vmul.f32 1.0, %v679
    %v681 = vrcp.pop %v659
    %v682 = vmul.f32 %v659, %v681
    %v683 = vsub.f32 1.0, %v682
    %v684 = vmul.f32 %v681, %v683
    %v685 = vadd.f32 %v681, %v684
    %vm686 = vweird.f32 %v659
    %vm687 = vweird.f32 %v681
    %vm688 = vmor %vm686, %vm687
    %v689 = vsel %vm688, %v681, %v685
    %v690 = vand.u32 2147483647, %v659
    %vm691 = vcmp.eq.f32.partialorder %v690, 8.507059e+37
    %v692 = vand.u32 %v659, 2147483648
    %v693 = vor.u32 1.1754944e-38, %v692
    %v694 = vsel %vm691, %v693, %v689
    %v695 = vmul.f32 1.0, %v694
    %v696 = vrcp.pop %v660
    %v697 = vmul.f32 %v660, %v696
    %v698 = vsub.f32 1.0, %v697
    %v699 = vmul.f32 %v696, %v698
    %v700 = vadd.f32 %v696, %v699
    %vm701 = vweird.f32 %v660
    %vm702 = vweird.f32 %v696
    %vm703 = vmor %vm701, %vm702
    %v704 = vsel %vm703, %v696, %v700
    %v705 = vand.u32 2147483647, %v660
    %vm706 = vcmp.eq.f32.partialorder %v705, 8.507059e+37
    %v707 = vand.u32 %v660, 2147483648
    %v708 = vor.u32 1.1754944e-38, %v707
    %v709 = vsel %vm706, %v708, %v704
    %v710 = vmul.f32 1.0, %v709
    %v711 = vrcp.pop %v661
    %v712 = vmul.f32 %v661, %v711
    %v713 = vsub.f32 1.0, %v712
    %v714 = vmul.f32 %v711, %v713
    %v715 = vadd.f32 %v711, %v714
    %vm716 = vweird.f32 %v661
    %vm717 = vweird.f32 %v711
    %vm718 = vmor %vm716, %vm717
    %v719 = vsel %vm718, %v711, %v715
    %v720 = vand.u32 2147483647, %v661
    %vm721 = vcmp.eq.f32.partialorder %v720, 8.507059e+37
    %v722 = vand.u32 %v661, 2147483648
    %v723 = vor.u32 1.1754944e-38, %v722
    %v724 = vsel %vm721, %v723, %v719
    %v725 = vmul.f32 1.0, %v724
    %v726 = vrcp.pop %v662
    %v727 = vmul.f32 %v662, %v726
    %v728 = vsub.f32 1.0, %v727
    %v729 = vmul.f32 %v726, %v728
    %v730 = vadd.f32 %v726, %v729
    %vm731 = vweird.f32 %v662
    %vm732 = vweird.f32 %v726
    %vm733 = vmor %vm731, %vm732
    %v734 = vsel %vm733, %v726, %v730
    %v735 = vand.u32 2147483647, %v662
    %vm736 = vcmp.eq.f32.partialorder %v735, 8.507059e+37
    %v737 = vand.u32 %v662, 2147483648
    %v738 = vor.u32 1.1754944e-38, %v737
    %v739 = vsel %vm736, %v738, %v734
    %v740 = vmul.f32 1.0, %v739
    %v741 = vrcp.pop %v663
    %v742 = vmul.f32 %v663, %v741
    %v743 = vsub.f32 1.0, %v742
    %v744 = vmul.f32 %v741, %v743
    %v745 = vadd.f32 %v741, %v744
    %vm746 = vweird.f32 %v663
    %vm747 = vweird.f32 %v741
    %vm748 = vmor %vm746, %vm747
    %v749 = vsel %vm748, %v741, %v745
    %v750 = vand.u32 2147483647, %v663
    %vm751 = vcmp.eq.f32.partialorder %v750, 8.507059e+37
    %v752 = vand.u32 %v663, 2147483648
    %v753 = vor.u32 1.1754944e-38, %v752
    %v754 = vsel %vm751, %v753, %v749
    %v755 = vmul.f32 1.0, %v754
    %v756 = vrcp.pop %v664
    %v757 = vmul.f32 %v664, %v756
    %v758 = vsub.f32 1.0, %v757
    %v759 = vmul.f32 %v756, %v758
    %v760 = vadd.f32 %v756, %v759
    %vm761 = vweird.f32 %v664
    %vm762 = vweird.f32 %v756
    %vm763 = vmor %vm761, %vm762
    %v764 = vsel %vm763, %v756, %v760
    %v765 = vand.u32 2147483647, %v664
    %vm766 = vcmp.eq.f32.partialorder %v765, 8.507059e+37
    %v767 = vand.u32 %v664, 2147483648
    %v768 = vor.u32 1.1754944e-38, %v767
    %v769 = vsel %vm766, %v768, %v764
    %v770 = vmul.f32 1.0, %v769
    %v771 = vrcp.pop %v665
    %v772 = vmul.f32 %v665, %v771
    %v773 = vsub.f32 1.0, %v772
    %v774 = vmul.f32 %v771, %v773
    %v775 = vadd.f32 %v771, %v774
    %vm776 = vweird.f32 %v665
    %vm777 = vweird.f32 %v771
    %vm778 = vmor %vm776, %vm777
    %v779 = vsel %vm778, %v771, %v775
    %v780 = vand.u32 2147483647, %v665
    %vm781 = vcmp.eq.f32.partialorder %v780, 8.507059e+37
    %v782 = vand.u32 %v665, 2147483648
    %v783 = vor.u32 1.1754944e-38, %v782
    %v784 = vsel %vm781, %v783, %v779
    %v785 = vmul.f32 1.0, %v784
    %v786 = vld [vmem:[#allocation8] sm:$0xff]
    %v787 = vld [vmem:[#allocation8 + $0x8] sm:$0xff]
    %v788 = vld [vmem:[#allocation8 + $0x10] sm:$0xff]
    %v789 = vld [vmem:[#allocation8 + $0x18] sm:$0xff]
    %v790 = vld [vmem:[#allocation8 + $0x20] sm:$0xff]
    %v791 = vld [vmem:[#allocation8 + $0x28] sm:$0xff]
    %v792 = vld [vmem:[#allocation8 + $0x30] sm:$0xff]
    %v793 = vld [vmem:[#allocation8 + $0x38] sm:$0xff]
    %v794 = vsub.f32 0.0, %v786
    %v795 = vsub.f32 0.0, %v787
    %v796 = vsub.f32 0.0, %v788
    %v797 = vsub.f32 0.0, %v789
    %v798 = vsub.f32 0.0, %v790
    %v799 = vsub.f32 0.0, %v791
    %v800 = vsub.f32 0.0, %v792
    %v801 = vsub.f32 0.0, %v793
    %v802 = vmul.f32 %v794, %v680
    %v803 = vmul.f32 %v795, %v695
    %v804 = vmul.f32 %v796, %v710
    %v805 = vmul.f32 %v797, %v725
    %v806 = vmul.f32 %v798, %v740
    %v807 = vmul.f32 %v799, %v755
    %v808 = vmul.f32 %v800, %v770
    %v809 = vmul.f32 %v801, %v785
    %v810 = vmul.f32 %v802, 1.442695
    %v811 = vpow.pop %v810
    %v812 = vmul.f32 %v803, 1.442695
    %v813 = vpow.pop %v812
    %v814 = vmul.f32 %v804, 1.442695
    %v815 = vpow.pop %v814
    %v816 = vmul.f32 %v805, 1.442695
    %v817 = vpow.pop %v816
    %v818 = vmul.f32 %v806, 1.442695
    %v819 = vpow.pop %v818
    %v820 = vmul.f32 %v807, 1.442695
    %v821 = vpow.pop %v820
    %v822 = vmul.f32 %v808, 1.442695
    %v823 = vpow.pop %v822
    %v824 = vmul.f32 %v809, 1.442695
    %v825 = vpow.pop %v824
    %v826 = vmul.f32 %v385, %v811
    %v827 = vmul.f32 %v400, %v813
    %v828 = vmul.f32 %v415, %v815
    %v829 = vmul.f32 %v430, %v817
    %v830 = vmul.f32 %v445, %v819
    %v831 = vmul.f32 %v460, %v821
    %v832 = vmul.f32 %v475, %v823
    %v833 = vmul.f32 %v490, %v825
    %v834 = vadd.f32 %v826, %v282
    %v835 = vadd.f32 %v827, %v283
    %v836 = vadd.f32 %v828, %v284
    %v837 = vadd.f32 %v829, %v285
    %v838 = vadd.f32 %v830, %v286
    %v839 = vadd.f32 %v831, %v287
    %v840 = vadd.f32 %v832, %v288
    %v841 = vadd.f32 %v833, %v289
    %v842 = vmul.f32 %v834, 1.442695
    %v843 = vpow.pop %v842
    %v844 = vmul.f32 %v835, 1.442695
    %v845 = vpow.pop %v844
    %v846 = vmul.f32 %v836, 1.442695
    %v847 = vpow.pop %v846
    %v848 = vmul.f32 %v837, 1.442695
    %v849 = vpow.pop %v848
    %v850 = vmul.f32 %v838, 1.442695
    %v851 = vpow.pop %v850
    %v852 = vmul.f32 %v839, 1.442695
    %v853 = vpow.pop %v852
    %v854 = vmul.f32 %v840, 1.442695
    %v855 = vpow.pop %v854
    %v856 = vmul.f32 %v841, 1.442695
    %v857 = vpow.pop %v856
    %v858 = vsel %vm298, %v843, 0.0
    %859 = vadd.xlane.f32.xlu0 %v858
    %v860 = vpop.xlane.xlu0 %859
    %v861 = vsel %vm298, %v845, 0.0
    %862 = vadd.xlane.f32.xlu0 %v861
    %v863 = vpop.xlane.xlu0 %862
    %v864 = vsel %vm298, %v847, 0.0
    %865 = vadd.xlane.f32.xlu0 %v864
    %v866 = vpop.xlane.xlu0 %865
    %v867 = vsel %vm298, %v849, 0.0
    %868 = vadd.xlane.f32.xlu0 %v867
    %v869 = vpop.xlane.xlu0 %868
    %v870 = vsel %vm298, %v851, 0.0
    %871 = vadd.xlane.f32.xlu0 %v870
    %v872 = vpop.xlane.xlu0 %871
    %v873 = vsel %vm298, %v853, 0.0
    %874 = vadd.xlane.f32.xlu0 %v873
    %v875 = vpop.xlane.xlu0 %874
    %v876 = vsel %vm298, %v855, 0.0
    %877 = vadd.xlane.f32.xlu0 %v876
    %v878 = vpop.xlane.xlu0 %877
    %v879 = vsel %vm298, %v857, 0.0
    %880 = vadd.xlane.f32.xlu0 %v879
    %v881 = vpop.xlane.xlu0 %880
    %v882 = vrcp.pop %v860
    %v883 = vmul.f32 %v860, %v882
    %v884 = vsub.f32 1.0, %v883
    %v885 = vmul.f32 %v882, %v884
    %v886 = vadd.f32 %v882, %v885
    %vm887 = vweird.f32 %v860
    %vm888 = vweird.f32 %v882
    %vm889 = vmor %vm887, %vm888
    %v890 = vsel %vm889, %v882, %v886
    %v891 = vand.u32 2147483647, %v860
    %vm892 = vcmp.eq.f32.partialorder %v891, 8.507059e+37
    %v893 = vand.u32 %v860, 2147483648
    %v894 = vor.u32 1.1754944e-38, %v893
    %v895 = vsel %vm892, %v894, %v890
    %v896 = vmul.f32 %v843, %v895
    %v897 = vrcp.pop %v863
    %v898 = vmul.f32 %v863, %v897
    %v899 = vsub.f32 1.0, %v898
    %v900 = vmul.f32 %v897, %v899
    %v901 = vadd.f32 %v897, %v900
    %vm902 = vweird.f32 %v863
    %vm903 = vweird.f32 %v897
    %vm904 = vmor %vm902, %vm903
    %v905 = vsel %vm904, %v897, %v901
    %v906 = vand.u32 2147483647, %v863
    %vm907 = vcmp.eq.f32.partialorder %v906, 8.507059e+37
    %v908 = vand.u32 %v863, 2147483648
    %v909 = vor.u32 1.1754944e-38, %v908
    %v910 = vsel %vm907, %v909, %v905
    %v911 = vmul.f32 %v845, %v910
    %v912 = vrcp.pop %v866
    %v913 = vmul.f32 %v866, %v912
    %v914 = vsub.f32 1.0, %v913
    %v915 = vmul.f32 %v912, %v914
    %v916 = vadd.f32 %v912, %v915
    %vm917 = vweird.f32 %v866
    %vm918 = vweird.f32 %v912
    %vm919 = vmor %vm917, %vm918
    %v920 = vsel %vm919, %v912, %v916
    %v921 = vand.u32 2147483647, %v866
    %vm922 = vcmp.eq.f32.partialorder %v921, 8.507059e+37
    %v923 = vand.u32 %v866, 2147483648
    %v924 = vor.u32 1.1754944e-38, %v923
    %v925 = vsel %vm922, %v924, %v920
    %v926 = vmul.f32 %v847, %v925
    %v927 = vrcp.pop %v869
    %v928 = vmul.f32 %v869, %v927
    %v929 = vsub.f32 1.0, %v928
    %v930 = vmul.f32 %v927, %v929
    %v931 = vadd.f32 %v927, %v930
    %vm932 = vweird.f32 %v869
    %vm933 = vweird.f32 %v927
    %vm934 = vmor %vm932, %vm933
    %v935 = vsel %vm934, %v927, %v931
    %v936 = vand.u32 2147483647, %v869
    %vm937 = vcmp.eq.f32.partialorder %v936, 8.507059e+37
    %v938 = vand.u32 %v869, 2147483648
    %v939 = vor.u32 1.1754944e-38, %v938
    %v940 = vsel %vm937, %v939, %v935
    %v941 = vmul.f32 %v849, %v940
    %v942 = vrcp.pop %v872
    %v943 = vmul.f32 %v872, %v942
    %v944 = vsub.f32 1.0, %v943
    %v945 = vmul.f32 %v942, %v944
    %v946 = vadd.f32 %v942, %v945
    %vm947 = vweird.f32 %v872
    %vm948 = vweird.f32 %v942
    %vm949 = vmor %vm947, %vm948
    %v950 = vsel %vm949, %v942, %v946
    %v951 = vand.u32 2147483647, %v872
    %vm952 = vcmp.eq.f32.partialorder %v951, 8.507059e+37
    %v953 = vand.u32 %v872, 2147483648
    %v954 = vor.u32 1.1754944e-38, %v953
    %v955 = vsel %vm952, %v954, %v950
    %v956 = vmul.f32 %v851, %v955
    %v957 = vrcp.pop %v875
    %v958 = vmul.f32 %v875, %v957
    %v959 = vsub.f32 1.0, %v958
    %v960 = vmul.f32 %v957, %v959
    %v961 = vadd.f32 %v957, %v960
    %vm962 = vweird.f32 %v875
    %vm963 = vweird.f32 %v957
    %vm964 = vmor %vm962, %vm963
    %v965 = vsel %vm964, %v957, %v961
    %v966 = vand.u32 2147483647, %v875
    %vm967 = vcmp.eq.f32.partialorder %v966, 8.507059e+37
    %v968 = vand.u32 %v875, 2147483648
    %v969 = vor.u32 1.1754944e-38, %v968
    %v970 = vsel %vm967, %v969, %v965
    %v971 = vmul.f32 %v853, %v970
    %v972 = vrcp.pop %v878
    %v973 = vmul.f32 %v878, %v972
    %v974 = vsub.f32 1.0, %v973
    %v975 = vmul.f32 %v972, %v974
    %v976 = vadd.f32 %v972, %v975
    %vm977 = vweird.f32 %v878
    %vm978 = vweird.f32 %v972
    %vm979 = vmor %vm977, %vm978
    %v980 = vsel %vm979, %v972, %v976
    %v981 = vand.u32 2147483647, %v878
    %vm982 = vcmp.eq.f32.partialorder %v981, 8.507059e+37
    %v983 = vand.u32 %v878, 2147483648
    %v984 = vor.u32 1.1754944e-38, %v983
    %v985 = vsel %vm982, %v984, %v980
    %v986 = vmul.f32 %v855, %v985
    %v987 = vrcp.pop %v881
    %v988 = vmul.f32 %v881, %v987
    %v989 = vsub.f32 1.0, %v988
    %v990 = vmul.f32 %v987, %v989
    %v991 = vadd.f32 %v987, %v990
    %vm992 = vweird.f32 %v881
    %vm993 = vweird.f32 %v987
    %vm994 = vmor %vm992, %vm993
    %v995 = vsel %vm994, %v987, %v991
    %v996 = vand.u32 2147483647, %v881
    %vm997 = vcmp.eq.f32.partialorder %v996, 8.507059e+37
    %v998 = vand.u32 %v881, 2147483648
    %v999 = vor.u32 1.1754944e-38, %v998
    %v1000 = vsel %vm997, %v999, %v995
    %v1001 = vmul.f32 %v857, %v1000
    %v1002 = vld [vmem:[%s9] sm:$0x1]
    %v1004 = vperm.slane %v1002, 0
    %1006 = vrot.lane.b32.xlu0 %v154, 64
    %v1007 = vpop.permute.xlu0 %1006
    %1008 = vrot.lane.b32.xlu0 %v157, 64
    %v1009 = vpop.permute.xlu0 %1008
    %1010 = vrot.lane.b32.xlu0 %v160, 64
    %v1011 = vpop.permute.xlu0 %1010
    %1012 = vrot.lane.b32.xlu0 %v163, 64
    %v1013 = vpop.permute.xlu0 %1012
    %1014 = vrot.lane.b32.xlu0 %v166, 64
    %v1015 = vpop.permute.xlu0 %1014
    %1016 = vrot.lane.b32.xlu0 %v169, 64
    %v1017 = vpop.permute.xlu0 %1016
    %1018 = vrot.lane.b32.xlu0 %v172, 64
    %v1019 = vpop.permute.xlu0 %1018
    %1020 = vrot.lane.b32.xlu0 %v175, 64
    %v1021 = vpop.permute.xlu0 %1020
    %v1031 = vsel %vm298, %v896, 0
    %v1034 = vsel %vm298, %v911, 0
    %v1037 = vsel %vm298, %v926, 0
    %v1040 = vsel %vm298, %v941, 0
    %v1043 = vsel %vm298, %v956, 0
    %v1046 = vsel %vm298, %v971, 0
    %v1049 = vsel %vm298, %v986, 0
    %v1052 = vsel %vm298, %v1001, 0
    %1054 = vmatpush.msra.mxu0 0.0
    %1055 = vmatpush.msra.mxu0 0.0
    %1056 = vmatpush.msra.mxu0 0.0
    %1057 = vmatpush.msra.mxu0 0.0
    %1058 = vmatpush.msra.mxu0 0.0
    %1059 = vmatpush.msra.mxu0 0.0
    %1060 = vmatpush.msra.mxu0 0.0
    %1061 = vmatpush.msra.mxu0 0.0
    %1062 = vmatpush.msra.mxu0 %v1021
    %1063 = vmatpush.msra.mxu0 %v1019
    %1064 = vmatpush.msra.mxu0 %v1017
    %1065 = vmatpush.msra.mxu0 %v1015
    %1066 = vmatpush.msra.mxu0 %v1013
    %1067 = vmatpush.msra.mxu0 %v1011
    %1068 = vmatpush.msra.mxu0 %v1009
    %1069 = vmatpush.msra.mxu0 %v1007
    %1070 = vmatmul.f32.gmra.mxu0 %v1031
    %v1071 = vpop.f32.mrf.mxu0
    %v1072 = vadd.f32 %v1004, %v1071
    %1073 = vmatmul.f32.gmra.mxu0 %v1034
    %v1074 = vpop.f32.mrf.mxu0
    %v1075 = vadd.f32 %v1004, %v1074
    %1076 = vmatmul.f32.gmra.mxu0 %v1037
    %v1077 = vpop.f32.mrf.mxu0
    %v1078 = vadd.f32 %v1004, %v1077
    %1079 = vmatmul.f32.gmra.mxu0 %v1040
    %v1080 = vpop.f32.mrf.mxu0
    %v1081 = vadd.f32 %v1004, %v1080
    %1082 = vmatmul.f32.gmra.mxu0 %v1043
    %v1083 = vpop.f32.mrf.mxu0
    %v1084 = vadd.f32 %v1004, %v1083
    %1085 = vmatmul.f32.gmra.mxu0 %v1046
    %v1086 = vpop.f32.mrf.mxu0
    %v1087 = vadd.f32 %v1004, %v1086
    %1088 = vmatmul.f32.gmra.mxu0 %v1049
    %v1089 = vpop.f32.mrf.mxu0
    %v1090 = vadd.f32 %v1004, %v1089
    %1091 = vmatmul.f32.gmra.mxu0 %v1052
    %v1092 = vpop.f32.mrf.mxu0
    %v1093 = vadd.f32 %v1004, %v1092
    %1094 = vdwg.mxu0
    %1095 = vst.msk [vmem:[%s10] sm:$0xff] %vm111, %v1072
    %1096 = vst.msk [vmem:[%s10 + $0x8] sm:$0xff] %vm111, %v1075
    %1097 = vst.msk [vmem:[%s10 + $0x10] sm:$0xff] %vm111, %v1078
    %1098 = vst.msk [vmem:[%s10 + $0x18] sm:$0xff] %vm111, %v1081
    %1099 = vst.msk [vmem:[%s10 + $0x20] sm:$0xff] %vm111, %v1084
    %1100 = vst.msk [vmem:[%s10 + $0x28] sm:$0xff] %vm111, %v1087
    %1101 = vst.msk [vmem:[%s10 + $0x30] sm:$0xff] %vm111, %v1090
    %1102 = vst.msk [vmem:[%s10 + $0x38] sm:$0xff] %vm111, %v1093
    // Predicated region
    $region58: #{tpu_custom_call.1} parent=1 // pred_check
      _
    $region59: #{tpu_custom_call.1} parent=1 // pred_check_branch
      %1104 = sbr.rel (0) target = $region61
    $region60: #{tpu_custom_call.1} parent=1 // pred_region
      _
    $region61: #{tpu_custom_call.1} parent=1 // pred_fallthru
      _
    // Predicated region
    $region62: #{tpu_custom_call.1} parent=1 // pred_check
      _
    $region63: #{tpu_custom_call.1} parent=1 // pred_check_branch
      %1106 = sbr.rel (0) target = $region65
    $region64: #{tpu_custom_call.1} parent=1 // pred_region
      _
    $region65: #{tpu_custom_call.1} parent=1 // pred_fallthru
      _
    %1107 = vsyncpa [#allocation4], 1
    %1108 = vsyncpa [#allocation6], 1
    %1109 = vsyncpa [#allocation9], 1

</llo_original>
